<compile_context>
chip_gen: v7x
topology: tpu7x:2x2x1
jax: 0.10.0
libtpu: 0.0.40
codegen_flags: <defaults>
</compile_context>

<pallas_src>
import math
import functools

import jax
import jax.numpy as jnp
from jax import lax
from jax.experimental import pallas as pl
from jax.experimental.pallas import tpu as pltpu


def _round_up(x, m):
    return ((x + m - 1) // m) * m


def _cdiv(a, b):
    return -(-a // b)


def _wawing_kernel(*refs, w, alpha, omega, epsilon, theta, has_wmap,
                   tn, tc, valid_rows, need_row_mask):
    if has_wmap:
        preds_ref, targets_ref, wmap_ref, out_ref = refs
    else:
        preds_ref, targets_ref, out_ref = refs
        wmap_ref = None

    p = preds_ref[...].astype(jnp.float32)
    t = targets_ref[...].astype(jnp.float32)
    diff = jnp.abs(t - p)
    case1 = diff < theta

    inv_eps = 1.0 / epsilon
    ln_r = math.log(theta / epsilon)       # log(theta/eps), host constant
    inv_r = epsilon / theta                # (theta/eps)**(-1), host constant

    # Shared exponent, selected BEFORE exp:
    #   case1: alpha * log(diff/eps)          -> E = (diff/eps)**alpha
    #   case2: (alpha - t) * log(theta/eps)   -> E = (theta/eps)**(alpha - t)
    # diff==0 (incl. zero padding) gives a huge negative arg -> E underflows to 0.
    pw = alpha - t
    d1 = jnp.maximum(diff * inv_eps, 1e-30)
    arg = jnp.where(case1, alpha * jnp.log(d1), pw * ln_r)
    E = jnp.exp(arg)
    L = jnp.log1p(E)

    # case2 extra term: loss2 = A*diff - C = A*(diff - theta) + omega*log1p(E)
    A = (omega * inv_eps) * pw * (E * inv_r) * pl.reciprocal(1.0 + E, approx=True)
    loss = omega * L + jnp.where(case1, 0.0, A * (diff - theta))

    if has_wmap:
        wm = wmap_ref[...].astype(jnp.float32)
    else:
        wm = (t > 0.0).astype(jnp.float32)          # default weight map
    weighted = loss * (w * wm + 1.0)

    # Lane-dense partial sums on the VPU (no XLU cross-lane reduce, no narrow
    # masked stores): fold 128-wide column groups, then 8-row sublane groups.
    partial = weighted[:, 0:128]
    for k in range(1, tc // 128):
        partial = partial + weighted[:, k * 128:(k + 1) * 128]     # (tn, 128)

    if need_row_mask:
        # Last (partial) tile overhangs the array: zero the garbage rows before
        # folding them into the output block. (where = select, NaN-safe.)
        row_ids = pl.program_id(0) * tn + lax.broadcasted_iota(
            jnp.int32, (tn, 128), 0)
        partial = jnp.where(row_ids < valid_rows, partial, 0.0)

    acc = partial[0:8, :]
    for r in range(8, tn, 8):
        acc = acc + partial[r:r + 8, :]                             # (8, 128)
    out_ref[...] = acc


def weighted_awing_loss(preds, targets, weight_map=None, *,
                        w=10.0, alpha=2.1, omega=14.0, epsilon=1.0, theta=0.5,
                        block_rows=512, min_tiles=2):
    """Pallas TPU implementation of WeightedAWingLoss.forward -> scalar mean.

    preds/targets stream in their HBM dtype (use bf16 end-to-end on v5e to
    halve HBM traffic); all math is f32 inside the kernel. weight_map streams
    in its native dtype (bool is converted to bf16 for 2 B/elem streaming).
    """
    assert preds.shape == targets.shape
    n = preds.size

    flat = [preds.reshape(-1), targets.reshape(-1)]
    has_wmap = weight_map is not None
    if has_wmap:
        assert weight_map.shape == preds.shape
        wm = weight_map.reshape(-1)
        if wm.dtype == jnp.bool_:
            wm = wm.astype(jnp.bfloat16)    # exact for {0,1}, half f32 traffic
        flat.append(wm)

    # Sublane granularity required by the narrowest streamed dtype.
    min_isize = min(x.dtype.itemsize for x in flat)
    sub = {4: 8, 2: 16, 1: 32}.get(min_isize, 8)

    # Lane-dense layout: widest lane dim (<=1024) that divides n exactly and
    # leaves >= sub rows, so no host-side zero-pad copy is needed.
    tc = None
    for cand in (1024, 512, 256, 128):
        if n % cand == 0 and n // cand >= sub:
            tc = cand
            break
    if tc is None:
        # Ragged fallback: 128-wide lanes, zero-pad the flat tail. Padded zeros
        # contribute exactly 0 to the loss sum (diff=0 -> loss 0, weight 1).
        tc = 128
        padded_n = max(_round_up(n, tc), sub * tc)
        pad = padded_n - n
    else:
        pad = 0

    rows = (n + pad) // tc

    # Row tile: ~block_rows*1024 elements per tile (~2 MiB f32/input/buffer).
    tn = min(_round_up(max((block_rows * 1024) // tc, sub), sub),
             _round_up(rows, sub))
    num_tiles = _cdiv(rows, tn)
    # v7x has 2 TensorCores: ensure the "parallel" axis has >= min_tiles tiles
    # whenever there is enough work to split.
    if num_tiles < min_tiles and rows > sub * min_tiles:
        tn = _round_up(_cdiv(rows, min_tiles), sub)
        num_tiles = _cdiv(rows, tn)

    need_row_mask = (rows % tn) != 0       # last tile overhangs the array

    def _prep(x):
        if pad:
            x = jnp.concatenate([x, jnp.zeros((pad,), x.dtype)])
        return x.reshape(rows, tc)

    arrs = [_prep(x) for x in flat]

    kernel = functools.partial(
        _wawing_kernel, w=float(w), alpha=float(alpha), omega=float(omega),
        epsilon=float(epsilon), theta=float(theta), has_wmap=has_wmap,
        tn=tn, tc=tc, valid_rows=rows, need_row_mask=need_row_mask)

    # Double-buffered input tiles + tiny output block; leave explicit headroom
    # over the per-generation scoped-VMEM defaults (v5e: 16 MiB).
    vmem_needed = sum(2 * tn * tc * a.dtype.itemsize for a in arrs) + 2 * 8 * 128 * 4
    vmem_limit = int(min(max(32 << 20, vmem_needed + (8 << 20)), 48 << 20))

    partials = pl.pallas_call(
        kernel,
        out_shape=jax.ShapeDtypeStruct((num_tiles * 8, 128), jnp.float32),
        grid=(num_tiles,),
        in_specs=[pl.BlockSpec((tn, tc), lambda i: (i, 0)) for _ in arrs],
        out_specs=pl.BlockSpec((8, 128), lambda i: (i, 0)),
        compiler_params=pltpu.CompilerParams(
            dimension_semantics=("parallel",),
            vmem_limit_bytes=vmem_limit),
    )(*arrs)

    # Tiny final reduction + mean in XLA.
    return jnp.sum(partials) / jnp.float32(n)


def _weighted_awing_ref(preds, targets, weight_map=None, *,
                        w=10.0, alpha=2.1, omega=14.0, epsilon=1.0, theta=0.5):
    # Pure-JAX reference following the PyTorch code literally (boolean-mask
    # scatter replaced by the equivalent jnp.where select).
    diff = jnp.abs(targets - preds)
    case1 = diff < theta
    loss1 = omega * jnp.log1p((diff / epsilon) ** alpha)
    A = (omega * (1.0 / (1.0 + (theta / epsilon) ** (alpha - targets)))
         * (alpha - targets) * (theta / epsilon) ** (alpha - targets - 1.0)
         * (1.0 / epsilon))
    C = theta * A - omega * jnp.log1p((theta / epsilon) ** (alpha - targets))
    loss2 = A * diff - C
    loss = jnp.where(case1, loss1, loss2)
    if weight_map is None:
        weight_map = targets > 0
    weighted = loss * (w * weight_map.astype(loss.dtype) + 1.0)
    return weighted.mean()


if __name__ == "__main__":
    key = jax.random.PRNGKey(0)
    k1, k2, k3, k4 = jax.random.split(key, 4)

    B, C, H, W = 2, 4, 16, 16               # heatmap-regression style shapes
    preds = jax.random.uniform(k1, (B, C, H, W), jnp.float32)
    targets = jax.random.uniform(k2, (B, C, H, W), jnp.float32)
    # Zero some targets so the default weight_map (targets > 0) is non-trivial
    # and both AWing branches (diff < / >= theta) are exercised.
    targets = targets * (jax.random.uniform(k3, (B, C, H, W)) > 0.3)

    # Default weight_map path (weight_map = targets > 0, computed in-kernel).
    out = weighted_awing_loss(preds, targets)
    jax.block_until_ready(out)
    ref = _weighted_awing_ref(preds, targets)
    assert jnp.allclose(out, ref, rtol=1e-3, atol=1e-3), (out, ref)

    # Explicit float32 weight_map path.
    wmap = (jax.random.uniform(k4, (B, C, H, W)) > 0.5).astype(jnp.float32)
    out2 = weighted_awing_loss(preds, targets, wmap)
    jax.block_until_ready(out2)
    ref2 = _weighted_awing_ref(preds, targets, wmap)
    assert jnp.allclose(out2, ref2, rtol=1e-3, atol=1e-3), (out2, ref2)

    # Explicit boolean weight_map (streams as bf16 inside the kernel).
    wmap_b = jax.random.uniform(k4, (B, C, H, W)) > 0.5
    out3 = weighted_awing_loss(preds, targets, wmap_b)
    jax.block_until_ready(out3)
    ref3 = _weighted_awing_ref(preds, targets, wmap_b.astype(jnp.float32))
    assert jnp.allclose(out3, ref3, rtol=1e-3, atol=1e-3), (out3, ref3)

    # Ragged total size: exercises the 128-lane fallback, the tiny zero-pad
    # tail, a 2-tile grid and the in-kernel row mask on the partial last tile.
    preds_r = jax.random.uniform(k1, (3, 5, 13, 13), jnp.float32)
    targets_r = jax.random.uniform(k2, (3, 5, 13, 13), jnp.float32)
    targets_r = targets_r * (jax.random.uniform(k3, (3, 5, 13, 13)) > 0.3)
    out4 = weighted_awing_loss(preds_r, targets_r)
    jax.block_until_ready(out4)
    ref4 = _weighted_awing_ref(preds_r, targets_r)
    assert jnp.allclose(out4, ref4, rtol=1e-3, atol=1e-3), (out4, ref4)

    print("KERNEL_OK")
</pallas_src>

<mosaic_0001>
module attributes {stable_mosaic.version = 11 : i64} {
  func.func @_wawing_kernel(%arg0: i32, %arg1: memref<8x256xf32, #tpu.memory_space<vmem>>, %arg2: memref<8x256xf32, #tpu.memory_space<vmem>>, %arg3: memref<8x128xf32, #tpu.memory_space<vmem>>) attributes {dimension_semantics = [#tpu.dimension_semantics<parallel>], iteration_bounds = array<i64: 1>, scalar_prefetch = 0 : i64, scratch_operands = 0 : i64, tpu.core_type = #tpu.core_type<tc>, window_params = [{transform_indices = @transform_0, window_bounds = array<i64: 8, 256>}, {transform_indices = @transform_1, window_bounds = array<i64: 8, 256>}, {transform_indices = @transform_2, window_bounds = array<i64: 8, 128>}]} {
    %c0 = arith.constant 0 : index
    %c0_0 = arith.constant 0 : index
    %0 = vector.load %arg1[%c0, %c0_0] : memref<8x256xf32, #tpu.memory_space<vmem>>, vector<8x256xf32>
    %c0_1 = arith.constant 0 : index
    %c0_2 = arith.constant 0 : index
    %1 = vector.load %arg2[%c0_1, %c0_2] : memref<8x256xf32, #tpu.memory_space<vmem>>, vector<8x256xf32>
    %2 = arith.subf %1, %0 : vector<8x256xf32>
    %3 = math.absf %2 : vector<8x256xf32>
    %cst = arith.constant 5.000000e-01 : f32
    %4 = vector.broadcast %cst : f32 to vector<8x256xf32>
    %5 = arith.cmpf olt, %3, %4 : vector<8x256xf32>
    %cst_3 = arith.constant 2.100000e+00 : f32
    %6 = vector.broadcast %cst_3 : f32 to vector<8x256xf32>
    %7 = arith.subf %6, %1 : vector<8x256xf32>
    %cst_4 = arith.constant 1.000000e+00 : f32
    %8 = vector.broadcast %cst_4 : f32 to vector<8x256xf32>
    %9 = arith.mulf %3, %8 : vector<8x256xf32>
    %cst_5 = arith.constant 1.000000e-30 : f32
    %10 = vector.broadcast %cst_5 : f32 to vector<8x256xf32>
    %11 = arith.maximumf %9, %10 : vector<8x256xf32>
    %12 = math.log %11 : vector<8x256xf32>
    %cst_6 = arith.constant 2.100000e+00 : f32
    %13 = vector.broadcast %cst_6 : f32 to vector<8x256xf32>
    %14 = arith.mulf %13, %12 : vector<8x256xf32>
    %cst_7 = arith.constant -0.693147182 : f32
    %15 = vector.broadcast %cst_7 : f32 to vector<8x256xf32>
    %16 = arith.mulf %7, %15 : vector<8x256xf32>
    %17 = arith.select %5, %14, %16 : vector<8x256xi1>, vector<8x256xf32>
    %18 = math.exp %17 : vector<8x256xf32>
    %19 = math.log1p %18 : vector<8x256xf32>
    %cst_8 = arith.constant 1.400000e+01 : f32
    %20 = vector.broadcast %cst_8 : f32 to vector<8x256xf32>
    %21 = arith.mulf %20, %7 : vector<8x256xf32>
    %cst_9 = arith.constant 2.000000e+00 : f32
    %22 = vector.broadcast %cst_9 : f32 to vector<8x256xf32>
    %23 = arith.mulf %18, %22 : vector<8x256xf32>
    %24 = arith.mulf %21, %23 : vector<8x256xf32>
    %cst_10 = arith.constant 1.000000e+00 : f32
    %25 = vector.broadcast %cst_10 : f32 to vector<8x256xf32>
    %26 = arith.addf %25, %18 : vector<8x256xf32>
    %27 = tpu.reciprocal %26 {approx = true} : vector<8x256xf32> -> vector<8x256xf32>
    %28 = arith.mulf %24, %27 : vector<8x256xf32>
    %cst_11 = arith.constant 1.400000e+01 : f32
    %29 = vector.broadcast %cst_11 : f32 to vector<8x256xf32>
    %30 = arith.mulf %29, %19 : vector<8x256xf32>
    %cst_12 = arith.constant 5.000000e-01 : f32
    %31 = vector.broadcast %cst_12 : f32 to vector<8x256xf32>
    %32 = arith.subf %3, %31 : vector<8x256xf32>
    %33 = arith.mulf %28, %32 : vector<8x256xf32>
    %cst_13 = arith.constant 0.000000e+00 : f32
    %34 = vector.broadcast %cst_13 : f32 to vector<8x256xf32>
    %35 = arith.select %5, %34, %33 : vector<8x256xi1>, vector<8x256xf32>
    %36 = arith.addf %30, %35 : vector<8x256xf32>
    %cst_14 = arith.constant 0.000000e+00 : f32
    %37 = vector.broadcast %cst_14 : f32 to vector<8x256xf32>
    %38 = arith.cmpf ogt, %1, %37 : vector<8x256xf32>
    %39 = arith.extui %38 : vector<8x256xi1> to vector<8x256xi32>
    %40 = arith.sitofp %39 : vector<8x256xi32> to vector<8x256xf32>
    %cst_15 = arith.constant 1.000000e+01 : f32
    %41 = vector.broadcast %cst_15 : f32 to vector<8x256xf32>
    %42 = arith.mulf %41, %40 : vector<8x256xf32>
    %cst_16 = arith.constant 1.000000e+00 : f32
    %43 = vector.broadcast %cst_16 : f32 to vector<8x256xf32>
    %44 = arith.addf %42, %43 : vector<8x256xf32>
    %45 = arith.mulf %36, %44 : vector<8x256xf32>
    %46 = vector.extract_strided_slice %45 {offsets = [0, 0], sizes = [8, 128], strides = [1, 1]} : vector<8x256xf32> to vector<8x128xf32>
    %47 = vector.extract_strided_slice %45 {offsets = [0, 128], sizes = [8, 128], strides = [1, 1]} : vector<8x256xf32> to vector<8x128xf32>
    %48 = arith.addf %46, %47 : vector<8x128xf32>
    %c0_17 = arith.constant 0 : index
    %c0_18 = arith.constant 0 : index
    %49 = vector.load %arg3[%c0_17, %c0_18] : memref<8x128xf32, #tpu.memory_space<vmem>>, vector<8x128xf32>
    tpu.vector_store %arg3[%c0_17, %c0_18], %48 {strides = array<i32>} : memref<8x128xf32, #tpu.memory_space<vmem>>, vector<8x128xf32>,
    return
  }
  func.func @transform_0(%arg0: i32) -> (i32, i32) {
    %c0_i32 = arith.constant 0 : i32
    %c0_i32_0 = arith.constant 0 : i32
    return %arg0, %c0_i32 : i32, i32
  }
  func.func @transform_1(%arg0: i32) -> (i32, i32) {
    %c0_i32 = arith.constant 0 : i32
    %c0_i32_0 = arith.constant 0 : i32
    return %arg0, %c0_i32 : i32, i32
  }
  func.func @transform_2(%arg0: i32) -> (i32, i32) {
    %c0_i32 = arith.constant 0 : i32
    %c0_i32_0 = arith.constant 0 : i32
    return %arg0, %c0_i32 : i32, i32
  }
}

</mosaic_0001>

<llo_original>
// kernel: tpu_custom_call.1
$region0: #{tpu_custom_call.1}
  #allocation0 [shape = 'u32[]', space=smem, size = 0x4, offset = 0x4, fixed_abs, tag = 'smem constant byte address 0x4 - core index']
  #allocation1 [shape = 'u32[144,128]{1,0:T(1,128)}', space=vmem, size = 0x12000, scoped, tag = 'internal scratch']
  %s0 = inlined_call_operand.hbm [shape: f32[8,256], index: 0, kind: input, shape index: {}]
  %s1 = inlined_call_operand.hbm [shape: f32[8,256], index: 1, kind: input, shape index: {}]
  %s2 = inlined_call_operand.hbm [shape: f32[8,128], index: 2, kind: output, shape index: {}]
  %s3 = sld [smem:[#allocation0]]
  $region26: #{tpu_custom_call.1} parent=0
    _
  %s5 = ssub.s32 1, %s3
  %s6 = scalar_select 0, %s5, %s3
  $region1: #{tpu_custom_call.1} parent=0
    #allocation2 [shape = 'u8[8192]{0}', space=vmem, size = 0x2000, scoped, tag = 'input window, operand 0, single buffered']
    #allocation3 [shape = 's32[1]{0}', space=sflag, size = 0x4, scoped, tag = 'scoped memory for tpu_custom_call.1']
    #allocation4 [shape = 's32[1]{0}', space=sflag, size = 0x4, scoped, tag = 'scoped memory for tpu_custom_call.1']
    #allocation5 [shape = 'u8[8192]{0}', space=vmem, size = 0x2000, scoped, tag = 'input window, operand 1, single buffered']
    #allocation6 [shape = 's32[1]{0}', space=sflag, size = 0x4, scoped, tag = 'scoped memory for tpu_custom_call.1']
    #allocation7 [shape = 'u8[4096]{0}', space=vmem, size = 0x1000, scoped, tag = 'output window, operand 0, single buffered']
    %7 = vsyncpa [#allocation3], 0
    %8 = vsyncpa [#allocation6], 0
    %9 = vsyncpa [#allocation4], 0
    // Predicated region
    $region2: #{tpu_custom_call.1} parent=1 // pred_check
      _
    $region3: #{tpu_custom_call.1} parent=1 // pred_check_branch
      %11 = sbr.rel (0) target = $region5
    $region4: #{tpu_custom_call.1} parent=1 // pred_region
      %s13 = ssub.s32 256, 256
      %14 = vsyncadd [#allocation3], %s13
      %s16 = sshll.u32 [#allocation2], 4
      %s17 = int_to_ptr.vmem [resolvable:$true] %s16
      %19 = dma.hbm_to_vmem [thread:$0]  %s0, 256, %s17, [#allocation3]
    $region5: #{tpu_custom_call.1} parent=1 // pred_fallthru
      _
    // Predicated region
    $region6: #{tpu_custom_call.1} parent=1 // pred_check
      _
    $region7: #{tpu_custom_call.1} parent=1 // pred_check_branch
      %21 = sbr.rel (0) target = $region9
    $region8: #{tpu_custom_call.1} parent=1 // pred_region
      %s23 = ssub.s32 256, 256
      %24 = vsyncadd [#allocation6], %s23
      %s26 = sshll.u32 [#allocation5], 4
      %s27 = int_to_ptr.vmem [resolvable:$true] %s26
      %29 = dma.hbm_to_vmem [thread:$0]  %s1, 256, %s27, [#allocation6]
    $region9: #{tpu_custom_call.1} parent=1 // pred_fallthru
      _
    // Predicated region
    $region10: #{tpu_custom_call.1} parent=1 // pred_check
      _
    $region11: #{tpu_custom_call.1} parent=1 // pred_check_branch
      %31 = sbr.rel (0) target = $region13
    $region12: #{tpu_custom_call.1} parent=1 // pred_region
      %32 = dma.done [#allocation3], 256
    $region13: #{tpu_custom_call.1} parent=1 // pred_fallthru
      _
    // Predicated region
    $region14: #{tpu_custom_call.1} parent=1 // pred_check
      _
    $region15: #{tpu_custom_call.1} parent=1 // pred_check_branch
      %34 = sbr.rel (0) target = $region17
    $region16: #{tpu_custom_call.1} parent=1 // pred_region
      %35 = dma.done [#allocation6], 256
    $region17: #{tpu_custom_call.1} parent=1 // pred_fallthru
      _
    %v36 = vld [vmem:[#allocation2] sm:$0xff]
    %v37 = vld [vmem:[#allocation2 + $0x8] sm:$0xff]
    %v38 = vld [vmem:[#allocation5] sm:$0xff]
    %v39 = vld [vmem:[#allocation5 + $0x8] sm:$0xff]
    %v40 = vsub.f32 %v38, %v36
    %v41 = vsub.f32 %v39, %v37
    %v42 = vand.u32 2147483647, %v40
    %v43 = vand.u32 2147483647, %v41
    %vm44 = vcmp.lt.f32.partialorder %v42, 0.5
    %vm45 = vcmp.lt.f32.partialorder %v43, 0.5
    %v46 = vsub.f32 2.1, %v38
    %v47 = vsub.f32 2.1, %v39
    %v48 = vmax.f32 %v42, 1e-30
    %v49 = vmax.f32 %v43, 1e-30
    %v50 = vlog2.pop %v48
    %v51 = vmul.f32 %v50, 0.6931472
    %v52 = vlog2.pop %v49
    %v53 = vmul.f32 %v52, 0.6931472
    %v54 = vmul.f32 %v51, 2.1
    %v55 = vmul.f32 %v53, 2.1
    %v56 = vmul.f32 %v46, -0.6931472
    %v57 = vmul.f32 %v47, -0.6931472
    %v58 = vsel %vm44, %v54, %v56
    %v59 = vsel %vm45, %v55, %v57
    %v60 = vmul.f32 %v58, 1.442695
    %v61 = vpow.pop %v60
    %v62 = vmul.f32 %v59, 1.442695
    %v63 = vpow.pop %v62
    %v64 = vadd.f32 %v61, 1.0
    %v65 = vlog2.pop %v64
    %v66 = vmul.f32 %v65, 0.6931472
    %v67 = vmul.f32 -0.5, %v61
    %v68 = vadd.f32 %v67, 1.0
    %v69 = vmul.f32 %v68, %v61
    %v70 = vand.u32 2147483647, %v61
    %vm71 = vcmp.lt.f32.partialorder %v70, 0.0004427343
    %v72 = vsel %vm71, %v69, %v66
    %v73 = vadd.f32 %v63, 1.0
    %v74 = vlog2.pop %v73
    %v75 = vmul.f32 %v74, 0.6931472
    %v76 = vmul.f32 -0.5, %v63
    %v77 = vadd.f32 %v76, 1.0
    %v78 = vmul.f32 %v77, %v63
    %v79 = vand.u32 2147483647, %v63
    %vm80 = vcmp.lt.f32.partialorder %v79, 0.0004427343
    %v81 = vsel %vm80, %v78, %v75
    %v82 = vmul.f32 %v46, 14.0
    %v83 = vmul.f32 %v47, 14.0
    %v84 = vmul.f32 %v61, 2.0
    %v85 = vmul.f32 %v63, 2.0
    %v86 = vmul.f32 %v82, %v84
    %v87 = vmul.f32 %v83, %v85
    %v88 = vadd.f32 %v61, 1.0
    %v89 = vadd.f32 %v63, 1.0
    %v90 = vrcp.pop %v88
    %v91 = vrcp.pop %v89
    %v92 = vmul.f32 %v86, %v90
    %v93 = vmul.f32 %v87, %v91
    %v94 = vmul.f32 %v72, 14.0
    %v95 = vmul.f32 %v81, 14.0
    %v96 = vsub.f32 %v42, 0.5
    %v97 = vsub.f32 %v43, 0.5
    %v98 = vmul.f32 %v92, %v96
    %v99 = vmul.f32 %v93, %v97
    %v100 = vsel %vm44, 0.0, %v98
    %v101 = vsel %vm45, 0.0, %v99
    %v102 = vadd.f32 %v94, %v100
    %v103 = vadd.f32 %v95, %v101
    %vm104 = vcmp.gt.f32.partialorder %v38, 0.0
    %vm105 = vcmp.gt.f32.partialorder %v39, 0.0
    %v106 = vsel %vm104, 1, 0
    %v107 = vsel %vm105, 1, 0
    %v108 = vcvt.s32.f32 %v106
    %v109 = vcvt.s32.f32 %v107
    %v110 = vmul.f32 %v108, 10.0
    %v111 = vmul.f32 %v109, 10.0
    %v112 = vadd.f32 %v110, 1.0
    %v113 = vadd.f32 %v111, 1.0
    %v114 = vmul.f32 %v102, %v112
    %v115 = vmul.f32 %v103, %v113
    %v116 = vadd.f32 %v114, %v115
    %117 = vst [vmem:[#allocation7] sm:$0xff] %v116
    // Predicated region
    $region18: #{tpu_custom_call.1} parent=1 // pred_check
      _
    $region19: #{tpu_custom_call.1} parent=1 // pred_check_branch
      %119 = sbr.rel (0) target = $region21
    $region20: #{tpu_custom_call.1} parent=1 // pred_region
      %s121 = ssub.s32 128, 128
      %122 = vsyncadd [#allocation4], %s121
      %s124 = sshll.u32 [#allocation7], 4
      %s125 = int_to_ptr.vmem [resolvable:$true] %s124
      %127 = dma.vmem_to_hbm [thread:$0]  %s125, 128, %s2, [#allocation4]
    $region21: #{tpu_custom_call.1} parent=1 // pred_fallthru
      _
    // Predicated region
    $region22: #{tpu_custom_call.1} parent=1 // pred_check
      _
    $region23: #{tpu_custom_call.1} parent=1 // pred_check_branch
      %129 = sbr.rel (0) target = $region25
    $region24: #{tpu_custom_call.1} parent=1 // pred_region
      %130 = dma.done [#allocation4], 128
    $region25: #{tpu_custom_call.1} parent=1 // pred_fallthru
      _
    %131 = vsyncpa [#allocation3], 1
    %132 = vsyncpa [#allocation6], 1
    %133 = vsyncpa [#allocation4], 1

</llo_original>
